<compile_context>
chip_gen: v7x
topology: tpu7x:2x2x1
jax: 0.10.0
libtpu: 0.0.40
codegen_flags: <defaults>
</compile_context>

<pallas_src>
import functools
import math

import jax
import jax.numpy as jnp
from jax import lax
from jax.experimental import pallas as pl
from jax.experimental.pallas import tpu as pltpu

# Tile caps (safe on v5e/v6e/v7x once vmem_limit_bytes is raised; worst-case
# f32 working set with these caps is ~11 MiB incl. double-buffering).
_TM_MAX = 512
_TN_MAX = 512
_TK_MAX = 1024
_LANE = 128


def _round_up(x, m):
    return (x + m - 1) // m * m


def _pick_tile(dim, cap, align):
    """Largest aligned tile <= cap; dim is padded up to a multiple of the tile."""
    padded = _round_up(dim, align)
    if padded <= cap:
        return padded, padded
    tile = (cap // align) * align
    return tile, _round_up(dim, tile)


def _linear_general_kernel(x_ref, w_ref, b_ref, o_ref, acc_ref):
    k = pl.program_id(2)

    @pl.when(k == 0)
    def _init():
        acc_ref[...] = jnp.zeros_like(acc_ref)

    # f32 operands: force exact f32 matmul (no bf16-pass emulation surprises).
    # bf16 operands: native MXU feed, exact f32 accumulation either way.
    prec = lax.Precision.HIGHEST if x_ref.dtype == jnp.float32 else None
    acc_ref[...] += jnp.dot(
        x_ref[...], w_ref[...],
        preferred_element_type=jnp.float32,
        precision=prec,
    )

    # Bias (already f32) + cast + store only on the final K step.
    @pl.when(k == pl.num_programs(2) - 1)
    def _store():
        o_ref[...] = (acc_ref[...] + b_ref[...]).astype(o_ref.dtype)


@functools.partial(jax.jit, static_argnames=("n_out",))
def _matmul_bias_pallas(x2d, w2d, b2d, *, n_out):
    """x2d: (M, K) any dtype. w2d: (Kp, Np) pre-padded compute dtype.
    b2d: (1, Np) f32. Returns (M, n_out) in x2d.dtype."""
    M, K = x2d.shape
    Kp, Np = w2d.shape
    out_dtype = x2d.dtype
    in_dtype = w2d.dtype

    if x2d.dtype != in_dtype:
        x2d = x2d.astype(in_dtype)

    in_bytes = jnp.dtype(in_dtype).itemsize
    out_bytes = jnp.dtype(out_dtype).itemsize

    # K / N tiles must divide the pre-padded weight dims (they do by
    # construction: Kp/Np are either <= cap or multiples of the cap).
    tk = min(_TK_MAX, Kp)
    tn = min(_TN_MAX, Np)

    # Sublane packing: f32 -> 8, bf16 -> 16, 8-bit -> 32.
    m_align = max(8, 32 // in_bytes)
    tm, Mp = _pick_tile(M, _TM_MAX, m_align)

    # v7x megacore: guarantee >=2 blocks along a parallel axis when possible,
    # otherwise the second TensorCore sits idle.
    if Mp // tm == 1 and Np // tn == 1 and Np >= 2 * _LANE:
        cand = (Np // 2) // _LANE * _LANE
        while cand >= _LANE:
            if Np % cand == 0:
                tn = cand
                break
            cand -= _LANE

    if (M, K) != (Mp, Kp):
        x2d = jnp.pad(x2d, ((0, Mp - M), (0, Kp - K)))

    m_tiles, n_tiles, k_tiles = Mp // tm, Np // tn, Kp // tk
    grid = (m_tiles, n_tiles, k_tiles)

    # Weight-streaming regime (single M tile, long K): deepen W pipeline.
    if m_tiles == 1 and k_tiles >= 3:
        w_bufs = 3
        w_spec = pl.BlockSpec((tk, tn), lambda i, j, k: (k, j),
                              pipeline_mode=pl.Buffered(3))
    else:
        w_bufs = 2
        w_spec = pl.BlockSpec((tk, tn), lambda i, j, k: (k, j))

    # Raise the scoped-VMEM limit so the bigger tiles compile on v5e's 16 MiB
    # default; cap at 64 MiB (v7x physical VMEM).
    vmem_budget = (2 * tm * tk * in_bytes
                   + w_bufs * tk * tn * in_bytes
                   + 2 * tm * tn * out_bytes
                   + tm * tn * 4
                   + 2 * tn * 4)
    vmem_limit = int(min(64 << 20, max(32 << 20, 2 * vmem_budget)))

    # Actual HBM traffic including re-streaming of X (per N pass) and W
    # (per M pass) so XLA can schedule neighbors around the kernel sensibly.
    cost = pl.CostEstimate(
        flops=2 * Mp * Np * Kp,
        transcendentals=0,
        bytes_accessed=(Mp * Kp * in_bytes * n_tiles
                        + Kp * Np * in_bytes * m_tiles
                        + Mp * Np * out_bytes
                        + Np * 4),
    )

    out = pl.pallas_call(
        _linear_general_kernel,
        out_shape=jax.ShapeDtypeStruct((Mp, Np), out_dtype),
        grid_spec=pltpu.PrefetchScalarGridSpec(
            num_scalar_prefetch=0,
            grid=grid,
            in_specs=[
                pl.BlockSpec((tm, tk), lambda i, j, k: (i, k)),
                w_spec,
                pl.BlockSpec((1, tn), lambda i, j, k: (0, j)),
            ],
            out_specs=pl.BlockSpec((tm, tn), lambda i, j, k: (i, j)),
            scratch_shapes=[pltpu.VMEM((tm, tn), jnp.float32)],
        ),
        compiler_params=pltpu.CompilerParams(
            dimension_semantics=("parallel", "parallel", "arbitrary"),
            vmem_limit_bytes=vmem_limit,
        ),
        cost_estimate=cost,
    )(x2d, w2d, b2d)

    if (Mp, Np) != (M, n_out):
        out = out[:M, :n_out]
    return out


class LinearGeneralPallas:
    """JAX/Pallas port of the PyTorch LinearGeneral module."""

    def __init__(self, in_dim=(768,), feat_dim=(12, 64), key=None,
                 dtype=jnp.float32, use_bf16_mxu=True):
        if key is None:
            key = jax.random.PRNGKey(0)
        self.in_dim = tuple(in_dim)
        self.feat_dim = tuple(feat_dim)
        # torch.randn-style init (standard normal), zeros bias.
        self.weight = jax.random.normal(key, self.in_dim + self.feat_dim, dtype=dtype)
        self.bias = jnp.zeros(self.feat_dim, dtype=dtype)
        # bf16 MXU feed (f32 accumulation) by default for f32 activations.
        self.use_bf16_mxu = use_bf16_mxu
        self._w_cache = {}

    # --- one-time weight/bias canonicalization (cached per layout/dtype) ---
    def _prepare_weight(self, w_perm_order, w_keep, compute_dtype):
        key = (tuple(w_perm_order), jnp.dtype(compute_dtype).name)
        if key in self._w_cache:
            return self._w_cache[key]

        w = self.weight
        if list(w_perm_order) != list(range(w.ndim)):
            w = jnp.transpose(w, w_perm_order)
        feat_shape = tuple(self.weight.shape[a] for a in w_keep)
        N = math.prod(feat_shape) if feat_shape else 1
        K = w.size // N
        w2d = w.reshape(K, N).astype(compute_dtype)

        _, Kp = _pick_tile(K, _TK_MAX, _LANE)
        _, Np = _pick_tile(N, _TN_MAX, _LANE)
        if (K, N) != (Kp, Np):
            w2d = jnp.pad(w2d, ((0, Kp - K), (0, Np - N)))

        # Fuse the bias in-kernel when the kept weight dims match the bias
        # shape (the module's common case); otherwise add it afterwards.
        fuse_bias = feat_shape == self.feat_dim
        if fuse_bias:
            b = self.bias.reshape(1, N).astype(jnp.float32)
        else:
            b = jnp.zeros((1, N), jnp.float32)
        if N != Np:
            b = jnp.pad(b, ((0, 0), (0, Np - N)))

        entry = (jax.device_put(w2d), jax.device_put(b), N, feat_shape, fuse_bias)
        self._w_cache[key] = entry
        return entry

    def __call__(self, x, dims, compute_dtype=None):
        # dims: int n, or (x_contract_axes, w_contract_axes) like torch.tensordot.
        if isinstance(dims, int):
            x_axes = list(range(x.ndim - dims, x.ndim))
            w_axes = list(range(dims))
        else:
            x_axes, w_axes = dims
            x_axes = [a % x.ndim for a in x_axes]
            w_axes = [a % self.weight.ndim for a in w_axes]

        x_keep = [a for a in range(x.ndim) if a not in x_axes]
        w_keep = [a for a in range(self.weight.ndim) if a not in w_axes]
        x_perm_order = x_keep + x_axes
        w_perm_order = w_axes + w_keep

        if compute_dtype is None:
            compute_dtype = (jnp.bfloat16
                             if (self.use_bf16_mxu and x.dtype == jnp.float32)
                             else x.dtype)

        w2d, b2d, N, feat_shape, fuse_bias = self._prepare_weight(
            w_perm_order, w_keep, compute_dtype)

        # Canonicalize the activations; the ViT qkv case dims=([2],[0]) leaves
        # x untouched (no-op transpose).
        x_perm = (x if x_perm_order == list(range(x.ndim))
                  else jnp.transpose(x, x_perm_order))
        batch_shape = tuple(x.shape[a] for a in x_keep)
        M = math.prod(batch_shape) if batch_shape else 1
        K = math.prod(x.shape[a] for a in x_axes) if x_axes else 1
        x2d = x_perm.reshape(M, K)

        out2d = _matmul_bias_pallas(x2d, w2d, b2d, n_out=N)
        out = out2d.reshape(batch_shape + feat_shape)
        if not fuse_bias:
            out = out + self.bias
        return out


def _reference(x, weight, bias, dims):
    return jnp.tensordot(x, weight, axes=dims,
                         precision=lax.Precision.HIGHEST) + bias


if __name__ == "__main__":
    key = jax.random.PRNGKey(0)
    k_x, k_w1, k_b1, k_w2, k_b2 = jax.random.split(key, 5)

    # Small ViT-like shapes: batch=2, seq=8, embed=32, heads=4, head_dim=16.
    B, S, D = 2, 8, 32
    H, Hd = 4, 16

    x = jax.random.normal(k_x, (B, S, D), dtype=jnp.float32)

    # --- qkv-style projection: contract the embed dim, dims=([2],[0]) ------
    m1 = LinearGeneralPallas(in_dim=(D,), feat_dim=(H, Hd), key=k_w1)
    m1.bias = jax.random.normal(k_b1, m1.feat_dim, dtype=jnp.float32) * 0.1
    dims1 = ([2], [0])

    # Exact f32 path.
    out_f32 = jax.block_until_ready(m1(x, dims1, compute_dtype=jnp.float32))
    ref_f32 = _reference(x, m1.weight, m1.bias, dims1)
    assert out_f32.shape == (B, S, H, Hd), out_f32.shape
    assert jnp.allclose(out_f32, ref_f32, atol=1e-4, rtol=1e-4), float(
        jnp.max(jnp.abs(out_f32 - ref_f32)))

    # Default bf16 MXU feed (f32 accumulation).
    out_bf = jax.block_until_ready(m1(x, dims1))
    x_b = x.astype(jnp.bfloat16).astype(jnp.float32)
    w_b = m1.weight.astype(jnp.bfloat16).astype(jnp.float32)
    ref_bf = _reference(x_b, w_b, m1.bias, dims1)
    assert out_bf.shape == (B, S, H, Hd), out_bf.shape
    assert jnp.allclose(out_bf, ref_bf, atol=1e-3, rtol=1e-3), float(
        jnp.max(jnp.abs(out_bf - ref_bf)))

    # --- out-projection style: contract (heads, head_dim), dims=2 ----------
    m2 = LinearGeneralPallas(in_dim=(H, Hd), feat_dim=(D,), key=k_w2)
    m2.bias = jax.random.normal(k_b2, m2.feat_dim, dtype=jnp.float32) * 0.1
    x2 = out_f32  # (B, S, H, Hd)

    out2 = jax.block_until_ready(m2(x2, 2, compute_dtype=jnp.float32))
    ref2 = _reference(x2, m2.weight, m2.bias, 2)
    assert out2.shape == (B, S, D), out2.shape
    assert jnp.allclose(out2, ref2, atol=1e-4, rtol=1e-4), float(
        jnp.max(jnp.abs(out2 - ref2)))

    print("KERNEL_OK")
</pallas_src>

<mosaic_0001>
module attributes {stable_mosaic.version = 11 : i64} {
  func.func @_linear_general_kernel(%arg0: i32, %arg1: i32, %arg2: i32, %arg3: memref<16x128xf32, #tpu.memory_space<vmem>>, %arg4: memref<128x128xf32, #tpu.memory_space<vmem>>, %arg5: memref<1x128xf32, #tpu.memory_space<vmem>>, %arg6: memref<16x128xf32, #tpu.memory_space<vmem>>, %arg7: memref<16x128xf32, #tpu.memory_space<vmem>>) attributes {dimension_semantics = [#tpu.dimension_semantics<parallel>, #tpu.dimension_semantics<parallel>, #tpu.dimension_semantics<arbitrary>], iteration_bounds = array<i64: 1, 1, 1>, scalar_prefetch = 0 : i64, scratch_operands = 1 : i64, tpu.core_type = #tpu.core_type<tc>, window_params = [{transform_indices = @transform_0, window_bounds = array<i64: 16, 128>}, {transform_indices = @transform_1, window_bounds = array<i64: 128, 128>}, {transform_indices = @transform_2, window_bounds = array<i64: 1, 128>}, {transform_indices = @transform_3, window_bounds = array<i64: 16, 128>}]} {
    %c0_i32 = arith.constant 0 : i32
    %0 = arith.cmpi eq, %arg2, %c0_i32 : i32
    %1 = arith.extui %0 : i1 to i32
    %c0_i32_0 = arith.constant 0 : i32
    %2 = arith.cmpi ne, %1, %c0_i32_0 : i32
    scf.if %2 {
      %cst_10 = arith.constant 0.000000e+00 : f32
      %12 = vector.broadcast %cst_10 : f32 to vector<16x128xf32>
      %c0_11 = arith.constant 0 : index
      %c0_12 = arith.constant 0 : index
      %13 = vector.load %arg7[%c0_11, %c0_12] : memref<16x128xf32, #tpu.memory_space<vmem>>, vector<16x128xf32>
      tpu.vector_store %arg7[%c0_11, %c0_12], %12 {strides = array<i32>} : memref<16x128xf32, #tpu.memory_space<vmem>>, vector<16x128xf32>,
    } else {
    }
    %c0 = arith.constant 0 : index
    %c0_1 = arith.constant 0 : index
    %3 = vector.load %arg7[%c0, %c0_1] : memref<16x128xf32, #tpu.memory_space<vmem>>, vector<16x128xf32>
    %c0_2 = arith.constant 0 : index
    %c0_3 = arith.constant 0 : index
    %4 = vector.load %arg3[%c0_2, %c0_3] : memref<16x128xf32, #tpu.memory_space<vmem>>, vector<16x128xf32>
    %c0_4 = arith.constant 0 : index
    %c0_5 = arith.constant 0 : index
    %5 = vector.load %arg4[%c0_4, %c0_5] : memref<128x128xf32, #tpu.memory_space<vmem>>, vector<128x128xf32>
    %cst = arith.constant dense<0.000000e+00> : vector<16x128xf32>
    %6 = tpu.matmul %4, %5, %cst {dimension_numbers = #tpu.dot_dimension_numbers<[1], [0], [0], [1], [0, 0, 1, 1], [], []>, precision = #tpu.contract_precision<fp32>} : vector<16x128xf32>, vector<128x128xf32>, vector<16x128xf32> -> vector<16x128xf32>
    %7 = arith.addf %3, %6 : vector<16x128xf32>
    %c0_6 = arith.constant 0 : index
    %c0_7 = arith.constant 0 : index
    %8 = vector.load %arg7[%c0_6, %c0_7] : memref<16x128xf32, #tpu.memory_space<vmem>>, vector<16x128xf32>
    tpu.vector_store %arg7[%c0_6, %c0_7], %7 {strides = array<i32>} : memref<16x128xf32, #tpu.memory_space<vmem>>, vector<16x128xf32>,
    %c0_i32_8 = arith.constant 0 : i32
    %9 = arith.cmpi eq, %arg2, %c0_i32_8 : i32
    %10 = arith.extui %9 : i1 to i32
    %c0_i32_9 = arith.constant 0 : i32
    %11 = arith.cmpi ne, %10, %c0_i32_9 : i32
    scf.if %11 {
      %c0_10 = arith.constant 0 : index
      %c0_11 = arith.constant 0 : index
      %12 = vector.load %arg7[%c0_10, %c0_11] : memref<16x128xf32, #tpu.memory_space<vmem>>, vector<16x128xf32>
      %c0_12 = arith.constant 0 : index
      %c0_13 = arith.constant 0 : index
      %13 = vector.load %arg5[%c0_12, %c0_13] : memref<1x128xf32, #tpu.memory_space<vmem>>, vector<1x128xf32>
      %14 = vector.broadcast %13 : vector<1x128xf32> to vector<16x128xf32>
      %15 = arith.addf %12, %14 : vector<16x128xf32>
      %c0_14 = arith.constant 0 : index
      %c0_15 = arith.constant 0 : index
      %16 = vector.load %arg6[%c0_14, %c0_15] : memref<16x128xf32, #tpu.memory_space<vmem>>, vector<16x128xf32>
      tpu.vector_store %arg6[%c0_14, %c0_15], %15 {strides = array<i32>} : memref<16x128xf32, #tpu.memory_space<vmem>>, vector<16x128xf32>,
    } else {
    }
    return
  }
  func.func @transform_0(%arg0: i32, %arg1: i32, %arg2: i32) -> (i32, i32) {
    %c0_i32 = arith.constant 0 : i32
    return %arg0, %arg2 : i32, i32
  }
  func.func @transform_1(%arg0: i32, %arg1: i32, %arg2: i32) -> (i32, i32) {
    %c0_i32 = arith.constant 0 : i32
    return %arg2, %arg1 : i32, i32
  }
  func.func @transform_2(%arg0: i32, %arg1: i32, %arg2: i32) -> (i32, i32) {
    %c0_i32 = arith.constant 0 : i32
    %c0_i32_0 = arith.constant 0 : i32
    return %c0_i32, %arg1 : i32, i32
  }
  func.func @transform_3(%arg0: i32, %arg1: i32, %arg2: i32) -> (i32, i32) {
    %c0_i32 = arith.constant 0 : i32
    return %arg0, %arg1 : i32, i32
  }
}

</mosaic_0001>

<llo_original>
// kernel: _matmul_bias_pallas.1
$region0: #{_matmul_bias_pallas.1}
  #allocation0 [shape = 'u32[]', space=smem, size = 0x4, offset = 0x4, fixed_abs, tag = 'smem constant byte address 0x4 - core index']
  #allocation1 [shape = 'u32[144,128]{1,0:T(1,128)}', space=vmem, size = 0x12000, scoped, tag = 'internal scratch']
  #allocation2 [shape = 'f32[16,128]{1,0:T(8,128)}', space=vmem, size = 0x2000, scoped, tag = 'scratch operand']
  %s0 = inlined_call_operand.vmem [shape: f32[16,128], index: 0, kind: input, shape index: {}]
  %s1 = inlined_call_operand.hbm [shape: f32[128,128], index: 1, kind: input, shape index: {}]
  %s2 = inlined_call_operand.vmem [shape: f32[1,128], index: 2, kind: input, shape index: {}]
  %s3 = inlined_call_operand.hbm [shape: f32[16,128], index: 3, kind: output, shape index: {}]
  %s4 = sld [smem:[#allocation0]]
  $region34: #{_matmul_bias_pallas.1} parent=0
    _
  %s6 = ssub.s32 1, %s4
  %s7 = scalar_select 0, %s6, %s4
  $region1: #{_matmul_bias_pallas.1} parent=0
    #allocation3 [shape = 'u8[65536]{0}', space=vmem, size = 0x10000, scoped, tag = 'input window, operand 1, single buffered']
    #allocation4 [shape = 's32[1]{0}', space=sflag, size = 0x4, scoped, tag = 'scoped memory for _matmul_bias_pallas.1']
    #allocation5 [shape = 's32[1]{0}', space=sflag, size = 0x4, scoped, tag = 'scoped memory for _matmul_bias_pallas.1']
    #allocation6 [shape = 'u8[8192]{0}', space=vmem, size = 0x2000, scoped, tag = 'output window, operand 0, single buffered']
    %8 = vsyncpa [#allocation4], 0
    %9 = vsyncpa [#allocation5], 0
    // Predicated region
    $region2: #{_matmul_bias_pallas.1} parent=1 // pred_check
      _
    $region3: #{_matmul_bias_pallas.1} parent=1 // pred_check_branch
      %11 = sbr.rel (0) target = $region5
    $region4: #{_matmul_bias_pallas.1} parent=1 // pred_region
      _
    $region5: #{_matmul_bias_pallas.1} parent=1 // pred_fallthru
      _
    // Predicated region
    $region6: #{_matmul_bias_pallas.1} parent=1 // pred_check
      _
    $region7: #{_matmul_bias_pallas.1} parent=1 // pred_check_branch
      %13 = sbr.rel (0) target = $region9
    $region8: #{_matmul_bias_pallas.1} parent=1 // pred_region
      %s15 = ssub.s32 2048, 2048
      %16 = vsyncadd [#allocation4], %s15
      %s17 = sshll.u32 [#allocation3], 4
      %s18 = int_to_ptr.vmem [resolvable:$true] %s17
      %23 = dma.hbm_to_vmem [thread:$0]  %s1, 2048, %s18, [#allocation4], 128, 128, 8
    $region9: #{_matmul_bias_pallas.1} parent=1 // pred_fallthru
      _
    // Predicated region
    $region10: #{_matmul_bias_pallas.1} parent=1 // pred_check
      _
    $region11: #{_matmul_bias_pallas.1} parent=1 // pred_check_branch
      %25 = sbr.rel (0) target = $region13
    $region12: #{_matmul_bias_pallas.1} parent=1 // pred_region
      _
    $region13: #{_matmul_bias_pallas.1} parent=1 // pred_fallthru
      _
    // Predicated region
    $region14: #{_matmul_bias_pallas.1} parent=1 // pred_check
      _
    $region15: #{_matmul_bias_pallas.1} parent=1 // pred_check_branch
      %27 = sbr.rel (0) target = $region17
    $region16: #{_matmul_bias_pallas.1} parent=1 // pred_region
      %28 = dma.done [#allocation4], 2048
    $region17: #{_matmul_bias_pallas.1} parent=1 // pred_fallthru
      _
    %p29 = scmp.eq.s32.totalorder 0, 0
    // Predicated region
    $region18: #{_matmul_bias_pallas.1} parent=1 // pred_check
      %p30 = pneg %p29
    $region19: #{_matmul_bias_pallas.1} parent=1 // pred_check_branch
      %32 = sbr.rel (%p30) target = $region21
    $region20: #{_matmul_bias_pallas.1} parent=1 // pred_region
      %33 = vst [vmem:[#allocation2] sm:$0xff] 0.0
      %34 = vst [vmem:[#allocation2 + $0x8] sm:$0xff] 0.0
    $region21: #{_matmul_bias_pallas.1} parent=1 // pred_fallthru
      _
    %v35 = vld [vmem:[#allocation2] sm:$0xff]
    %v36 = vld [vmem:[#allocation2 + $0x8] sm:$0xff]
    %v37 = vld [vmem:[%s0] sm:$0xff]
    %v38 = vld [vmem:[%s0 + $0x8] sm:$0xff]
    %v39 = vld [vmem:[#allocation3] sm:$0xff]
    %v40 = vld [vmem:[#allocation3 + $0x8] sm:$0xff]
    %v41 = vld [vmem:[#allocation3 + $0x10] sm:$0xff]
    %v42 = vld [vmem:[#allocation3 + $0x18] sm:$0xff]
    %v43 = vld [vmem:[#allocation3 + $0x20] sm:$0xff]
    %v44 = vld [vmem:[#allocation3 + $0x28] sm:$0xff]
    %v45 = vld [vmem:[#allocation3 + $0x30] sm:$0xff]
    %v46 = vld [vmem:[#allocation3 + $0x38] sm:$0xff]
    %v47 = vld [vmem:[#allocation3 + $0x40] sm:$0xff]
    %v48 = vld [vmem:[#allocation3 + $0x48] sm:$0xff]
    %v49 = vld [vmem:[#allocation3 + $0x50] sm:$0xff]
    %v50 = vld [vmem:[#allocation3 + $0x58] sm:$0xff]
    %v51 = vld [vmem:[#allocation3 + $0x60] sm:$0xff]
    %v52 = vld [vmem:[#allocation3 + $0x68] sm:$0xff]
    %v53 = vld [vmem:[#allocation3 + $0x70] sm:$0xff]
    %v54 = vld [vmem:[#allocation3 + $0x78] sm:$0xff]
    %55 = vmatprep.subr.mxu0 0.0
    %v56 = vand.u32 %v39, 4294901760
    %57 = vmatpush1.msra.mxu0 %v56
    %58 = vmatprep.subr.mxu0 0.0
    %v59 = vand.u32 %v40, 4294901760
    %60 = vmatpush1.msra.mxu0 %v59
    %61 = vmatprep.subr.mxu0 0.0
    %v62 = vand.u32 %v41, 4294901760
    %63 = vmatpush1.msra.mxu0 %v62
    %64 = vmatprep.subr.mxu0 0.0
    %v65 = vand.u32 %v42, 4294901760
    %66 = vmatpush1.msra.mxu0 %v65
    %67 = vmatprep.subr.mxu0 0.0
    %v68 = vand.u32 %v43, 4294901760
    %69 = vmatpush1.msra.mxu0 %v68
    %70 = vmatprep.subr.mxu0 0.0
    %v71 = vand.u32 %v44, 4294901760
    %72 = vmatpush1.msra.mxu0 %v71
    %73 = vmatprep.subr.mxu0 0.0
    %v74 = vand.u32 %v45, 4294901760
    %75 = vmatpush1.msra.mxu0 %v74
    %76 = vmatprep.subr.mxu0 0.0
    %v77 = vand.u32 %v46, 4294901760
    %78 = vmatpush1.msra.mxu0 %v77
    %79 = vmatprep.subr.mxu0 0.0
    %v80 = vand.u32 %v47, 4294901760
    %81 = vmatpush1.msra.mxu0 %v80
    %82 = vmatprep.subr.mxu0 0.0
    %v83 = vand.u32 %v48, 4294901760
    %84 = vmatpush1.msra.mxu0 %v83
    %85 = vmatprep.subr.mxu0 0.0
    %v86 = vand.u32 %v49, 4294901760
    %87 = vmatpush1.msra.mxu0 %v86
    %88 = vmatprep.subr.mxu0 0.0
    %v89 = vand.u32 %v50, 4294901760
    %90 = vmatpush1.msra.mxu0 %v89
    %91 = vmatprep.subr.mxu0 0.0
    %v92 = vand.u32 %v51, 4294901760
    %93 = vmatpush1.msra.mxu0 %v92
    %94 = vmatprep.subr.mxu0 0.0
    %v95 = vand.u32 %v52, 4294901760
    %96 = vmatpush1.msra.mxu0 %v95
    %97 = vmatprep.subr.mxu0 0.0
    %v98 = vand.u32 %v53, 4294901760
    %99 = vmatpush1.msra.mxu0 %v98
    %100 = vmatprep.subr.mxu0 0.0
    %v101 = vand.u32 %v54, 4294901760
    %102 = vmatpush1.msra.mxu0 %v101
    %103 = vmatprep.subr.mxu0 0.0
    %104 = vmatpush1.msra.mxu0 0.0
    %105 = vmatprep.subr.mxu0 0.0
    %106 = vmatpush1.msra.mxu0 0.0
    %107 = vmatprep.subr.mxu0 0.0
    %108 = vmatpush1.msra.mxu0 0.0
    %109 = vmatprep.subr.mxu0 0.0
    %110 = vmatpush1.msra.mxu0 0.0
    %111 = vmatprep.subr.mxu0 0.0
    %112 = vmatpush1.msra.mxu0 0.0
    %113 = vmatprep.subr.mxu0 0.0
    %114 = vmatpush1.msra.mxu0 0.0
    %115 = vmatprep.subr.mxu0 0.0
    %116 = vmatpush1.msra.mxu0 0.0
    %117 = vmatprep.subr.mxu0 0.0
    %118 = vmatpush1.msra.mxu0 0.0
    %119 = vmatprep.subr.mxu0 0.0
    %120 = vmatpush1.msra.mxu0 0.0
    %121 = vmatprep.subr.mxu0 0.0
    %122 = vmatpush1.msra.mxu0 0.0
    %123 = vmatprep.subr.mxu0 0.0
    %124 = vmatpush1.msra.mxu0 0.0
    %125 = vmatprep.subr.mxu0 0.0
    %126 = vmatpush1.msra.mxu0 0.0
    %127 = vmatprep.subr.mxu0 0.0
    %128 = vmatpush1.msra.mxu0 0.0
    %129 = vmatprep.subr.mxu0 0.0
    %130 = vmatpush1.msra.mxu0 0.0
    %131 = vmatprep.subr.mxu0 0.0
    %132 = vmatpush1.msra.mxu0 0.0
    %133 = vmatprep.subr.mxu0 0.0
    %134 = vmatpush1.msra.mxu0 0.0
    %135 = vmatprep.mubr.f32.mxu0 0.0
    %v136 = vand.u32 %v37, 4294901760
    %v137 = vsub.f32 %v37, %v136
    %v138 = vand.u32 %v137, 4294901760
    %v139 = vsub.f32 %v137, %v138
    %v140 = vand.u32 %v139, 4294901760
    %141 = vmatmul.mubr.f32.gmra.mrb[0].mxu0 %v140
    %v142 = vpop.f32.mrb[0].mxu0
    %v143 = vadd.f32 0.0, %v142
    %v144 = vpop.f32.mrb[0].mxu0
    %145 = vmatprep.mubr.f32.mxu0 0.0
    %v146 = vand.u32 %v38, 4294901760
    %v147 = vsub.f32 %v38, %v146
    %v148 = vand.u32 %v147, 4294901760
    %v149 = vsub.f32 %v147, %v148
    %v150 = vand.u32 %v149, 4294901760
    %151 = vmatmul.mubr.f32.gmra.mrb[0].mxu0 %v150
    %v152 = vpop.f32.mrb[0].mxu0
    %v153 = vadd.f32 0.0, %v152
    %v154 = vpop.f32.mrb[0].mxu0
    %155 = vdwg.mxu0
    %156 = vmatprep.subr.mxu0 0.0
    %v157 = vand.u32 %v39, 4294901760
    %v158 = vsub.f32 %v39, %v157
    %v159 = vand.u32 %v158, 4294901760
    %v160 = vsub.f32 %v158, %v159
    %v161 = vand.u32 %v160, 4294901760
    %162 = vmatpush1.msra.mxu0 %v161
    %163 = vmatprep.subr.mxu0 0.0
    %v164 = vand.u32 %v40, 4294901760
    %v165 = vsub.f32 %v40, %v164
    %v166 = vand.u32 %v165, 4294901760
    %v167 = vsub.f32 %v165, %v166
    %v168 = vand.u32 %v167, 4294901760
    %169 = vmatpush1.msra.mxu0 %v168
    %170 = vmatprep.subr.mxu0 0.0
    %v171 = vand.u32 %v41, 4294901760
    %v172 = vsub.f32 %v41, %v171
    %v173 = vand.u32 %v172, 4294901760
    %v174 = vsub.f32 %v172, %v173
    %v175 = vand.u32 %v174, 4294901760
    %176 = vmatpush1.msra.mxu0 %v175
    %177 = vmatprep.subr.mxu0 0.0
    %v178 = vand.u32 %v42, 4294901760
    %v179 = vsub.f32 %v42, %v178
    %v180 = vand.u32 %v179, 4294901760
    %v181 = vsub.f32 %v179, %v180
    %v182 = vand.u32 %v181, 4294901760
    %183 = vmatpush1.msra.mxu0 %v182
    %184 = vmatprep.subr.mxu0 0.0
    %v185 = vand.u32 %v43, 4294901760
    %v186 = vsub.f32 %v43, %v185
    %v187 = vand.u32 %v186, 4294901760
    %v188 = vsub.f32 %v186, %v187
    %v189 = vand.u32 %v188, 4294901760
    %190 = vmatpush1.msra.mxu0 %v189
    %191 = vmatprep.subr.mxu0 0.0
    %v192 = vand.u32 %v44, 4294901760
    %v193 = vsub.f32 %v44, %v192
    %v194 = vand.u32 %v193, 4294901760
    %v195 = vsub.f32 %v193, %v194
    %v196 = vand.u32 %v195, 4294901760
    %197 = vmatpush1.msra.mxu0 %v196
    %198 = vmatprep.subr.mxu0 0.0
    %v199 = vand.u32 %v45, 4294901760
    %v200 = vsub.f32 %v45, %v199
    %v201 = vand.u32 %v200, 4294901760
    %v202 = vsub.f32 %v200, %v201
    %v203 = vand.u32 %v202, 4294901760
    %204 = vmatpush1.msra.mxu0 %v203
    %205 = vmatprep.subr.mxu0 0.0
    %v206 = vand.u32 %v46, 4294901760
    %v207 = vsub.f32 %v46, %v206
    %v208 = vand.u32 %v207, 4294901760
    %v209 = vsub.f32 %v207, %v208
    %v210 = vand.u32 %v209, 4294901760
    %211 = vmatpush1.msra.mxu0 %v210
    %212 = vmatprep.subr.mxu0 0.0
    %v213 = vand.u32 %v47, 4294901760
    %v214 = vsub.f32 %v47, %v213
    %v215 = vand.u32 %v214, 4294901760
    %v216 = vsub.f32 %v214, %v215
    %v217 = vand.u32 %v216, 4294901760
    %218 = vmatpush1.msra.mxu0 %v217
    %219 = vmatprep.subr.mxu0 0.0
    %v220 = vand.u32 %v48, 4294901760
    %v221 = vsub.f32 %v48, %v220
    %v222 = vand.u32 %v221, 4294901760
    %v223 = vsub.f32 %v221, %v222
    %v224 = vand.u32 %v223, 4294901760
    %225 = vmatpush1.msra.mxu0 %v224
    %226 = vmatprep.subr.mxu0 0.0
    %v227 = vand.u32 %v49, 4294901760
    %v228 = vsub.f32 %v49, %v227
    %v229 = vand.u32 %v228, 4294901760
    %v230 = vsub.f32 %v228, %v229
    %v231 = vand.u32 %v230, 4294901760
    %232 = vmatpush1.msra.mxu0 %v231
    %233 = vmatprep.subr.mxu0 0.0
    %v234 = vand.u32 %v50, 4294901760
    %v235 = vsub.f32 %v50, %v234
    %v236 = vand.u32 %v235, 4294901760
    %v237 = vsub.f32 %v235, %v236
    %v238 = vand.u32 %v237, 4294901760
    %239 = vmatpush1.msra.mxu0 %v238
    %240 = vmatprep.subr.mxu0 0.0
    %v241 = vand.u32 %v51, 4294901760
    %v242 = vsub.f32 %v51, %v241
    %v243 = vand.u32 %v242, 4294901760
    %v244 = vsub.f32 %v242, %v243
    %v245 = vand.u32 %v244, 4294901760
    %246 = vmatpush1.msra.mxu0 %v245
    %247 = vmatprep.subr.mxu0 0.0
    %v248 = vand.u32 %v52, 4294901760
    %v249 = vsub.f32 %v52, %v248
    %v250 = vand.u32 %v249, 4294901760
    %v251 = vsub.f32 %v249, %v250
    %v252 = vand.u32 %v251, 4294901760
    %253 = vmatpush1.msra.mxu0 %v252
    %254 = vmatprep.subr.mxu0 0.0
    %v255 = vand.u32 %v53, 4294901760
    %v256 = vsub.f32 %v53, %v255
    %v257 = vand.u32 %v256, 4294901760
    %v258 = vsub.f32 %v256, %v257
    %v259 = vand.u32 %v258, 4294901760
    %260 = vmatpush1.msra.mxu0 %v259
    %261 = vmatprep.subr.mxu0 0.0
    %v262 = vand.u32 %v54, 4294901760
    %v263 = vsub.f32 %v54, %v262
    %v264 = vand.u32 %v263, 4294901760
    %v265 = vsub.f32 %v263, %v264
    %v266 = vand.u32 %v265, 4294901760
    %267 = vmatpush1.msra.mxu0 %v266
    %268 = vmatprep.subr.mxu0 0.0
    %269 = vmatpush1.msra.mxu0 0.0
    %270 = vmatprep.subr.mxu0 0.0
    %271 = vmatpush1.msra.mxu0 0.0
    %272 = vmatprep.subr.mxu0 0.0
    %273 = vmatpush1.msra.mxu0 0.0
    %274 = vmatprep.subr.mxu0 0.0
    %275 = vmatpush1.msra.mxu0 0.0
    %276 = vmatprep.subr.mxu0 0.0
    %277 = vmatpush1.msra.mxu0 0.0
    %278 = vmatprep.subr.mxu0 0.0
    %279 = vmatpush1.msra.mxu0 0.0
    %280 = vmatprep.subr.mxu0 0.0
    %281 = vmatpush1.msra.mxu0 0.0
    %282 = vmatprep.subr.mxu0 0.0
    %283 = vmatpush1.msra.mxu0 0.0
    %284 = vmatprep.subr.mxu0 0.0
    %285 = vmatpush1.msra.mxu0 0.0
    %286 = vmatprep.subr.mxu0 0.0
    %287 = vmatpush1.msra.mxu0 0.0
    %288 = vmatprep.subr.mxu0 0.0
    %289 = vmatpush1.msra.mxu0 0.0
    %290 = vmatprep.subr.mxu0 0.0
    %291 = vmatpush1.msra.mxu0 0.0
    %292 = vmatprep.subr.mxu0 0.0
    %293 = vmatpush1.msra.mxu0 0.0
    %294 = vmatprep.subr.mxu0 0.0
    %295 = vmatpush1.msra.mxu0 0.0
    %296 = vmatprep.subr.mxu0 0.0
    %297 = vmatpush1.msra.mxu0 0.0
    %298 = vmatprep.subr.mxu0 0.0
    %299 = vmatpush1.msra.mxu0 0.0
    %300 = vmatprep.mubr.f32.mxu0 0.0
    %v301 = vand.u32 %v37, 4294901760
    %302 = vmatmul.mubr.f32.gmra.mrb[0].mxu0 %v301
    %v303 = vpop.f32.mrb[0].mxu0
    %v304 = vadd.f32 %v143, %v303
    %v305 = vpop.f32.mrb[0].mxu0
    %306 = vmatprep.mubr.f32.mxu0 0.0
    %v307 = vand.u32 %v38, 4294901760
    %308 = vmatmul.mubr.f32.gmra.mrb[0].mxu0 %v307
    %v309 = vpop.f32.mrb[0].mxu0
    %v310 = vadd.f32 %v153, %v309
    %v311 = vpop.f32.mrb[0].mxu0
    %312 = vdwg.mxu0
    %313 = vmatprep.subr.mxu0 0.0
    %v314 = vand.u32 %v39, 4294901760
    %v315 = vsub.f32 %v39, %v314
    %316 = vmatpush1.msra.mxu0 %v315
    %317 = vmatprep.subr.mxu0 0.0
    %v318 = vand.u32 %v40, 4294901760
    %v319 = vsub.f32 %v40, %v318
    %320 = vmatpush1.msra.mxu0 %v319
    %321 = vmatprep.subr.mxu0 0.0
    %v322 = vand.u32 %v41, 4294901760
    %v323 = vsub.f32 %v41, %v322
    %324 = vmatpush1.msra.mxu0 %v323
    %325 = vmatprep.subr.mxu0 0.0
    %v326 = vand.u32 %v42, 4294901760
    %v327 = vsub.f32 %v42, %v326
    %328 = vmatpush1.msra.mxu0 %v327
    %329 = vmatprep.subr.mxu0 0.0
    %v330 = vand.u32 %v43, 4294901760
    %v331 = vsub.f32 %v43, %v330
    %332 = vmatpush1.msra.mxu0 %v331
    %333 = vmatprep.subr.mxu0 0.0
    %v334 = vand.u32 %v44, 4294901760
    %v335 = vsub.f32 %v44, %v334
    %336 = vmatpush1.msra.mxu0 %v335
    %337 = vmatprep.subr.mxu0 0.0
    %v338 = vand.u32 %v45, 4294901760
    %v339 = vsub.f32 %v45, %v338
    %340 = vmatpush1.msra.mxu0 %v339
    %341 = vmatprep.subr.mxu0 0.0
    %v342 = vand.u32 %v46, 4294901760
    %v343 = vsub.f32 %v46, %v342
    %344 = vmatpush1.msra.mxu0 %v343
    %345 = vmatprep.subr.mxu0 0.0
    %v346 = vand.u32 %v47, 4294901760
    %v347 = vsub.f32 %v47, %v346
    %348 = vmatpush1.msra.mxu0 %v347
    %349 = vmatprep.subr.mxu0 0.0
    %v350 = vand.u32 %v48, 4294901760
    %v351 = vsub.f32 %v48, %v350
    %352 = vmatpush1.msra.mxu0 %v351
    %353 = vmatprep.subr.mxu0 0.0
    %v354 = vand.u32 %v49, 4294901760
    %v355 = vsub.f32 %v49, %v354
    %356 = vmatpush1.msra.mxu0 %v355
    %357 = vmatprep.subr.mxu0 0.0
    %v358 = vand.u32 %v50, 4294901760
    %v359 = vsub.f32 %v50, %v358
    %360 = vmatpush1.msra.mxu0 %v359
    %361 = vmatprep.subr.mxu0 0.0
    %v362 = vand.u32 %v51, 4294901760
    %v363 = vsub.f32 %v51, %v362
    %364 = vmatpush1.msra.mxu0 %v363
    %365 = vmatprep.subr.mxu0 0.0
    %v366 = vand.u32 %v52, 4294901760
    %v367 = vsub.f32 %v52, %v366
    %368 = vmatpush1.msra.mxu0 %v367
    %369 = vmatprep.subr.mxu0 0.0
    %v370 = vand.u32 %v53, 4294901760
    %v371 = vsub.f32 %v53, %v370
    %372 = vmatpush1.msra.mxu0 %v371
    %373 = vmatprep.subr.mxu0 0.0
    %v374 = vand.u32 %v54, 4294901760
    %v375 = vsub.f32 %v54, %v374
    %376 = vmatpush1.msra.mxu0 %v375
    %377 = vmatprep.subr.mxu0 0.0
    %378 = vmatpush1.msra.mxu0 0.0
    %379 = vmatprep.subr.mxu0 0.0
    %380 = vmatpush1.msra.mxu0 0.0
    %381 = vmatprep.subr.mxu0 0.0
    %382 = vmatpush1.msra.mxu0 0.0
    %383 = vmatprep.subr.mxu0 0.0
    %384 = vmatpush1.msra.mxu0 0.0
    %385 = vmatprep.subr.mxu0 0.0
    %386 = vmatpush1.msra.mxu0 0.0
    %387 = vmatprep.subr.mxu0 0.0
    %388 = vmatpush1.msra.mxu0 0.0
    %389 = vmatprep.subr.mxu0 0.0
    %390 = vmatpush1.msra.mxu0 0.0
    %391 = vmatprep.subr.mxu0 0.0
    %392 = vmatpush1.msra.mxu0 0.0
    %393 = vmatprep.subr.mxu0 0.0
    %394 = vmatpush1.msra.mxu0 0.0
    %395 = vmatprep.subr.mxu0 0.0
    %396 = vmatpush1.msra.mxu0 0.0
    %397 = vmatprep.subr.mxu0 0.0
    %398 = vmatpush1.msra.mxu0 0.0
    %399 = vmatprep.subr.mxu0 0.0
    %400 = vmatpush1.msra.mxu0 0.0
    %401 = vmatprep.subr.mxu0 0.0
    %402 = vmatpush1.msra.mxu0 0.0
    %403 = vmatprep.subr.mxu0 0.0
    %404 = vmatpush1.msra.mxu0 0.0
    %405 = vmatprep.subr.mxu0 0.0
    %406 = vmatpush1.msra.mxu0 0.0
    %407 = vmatprep.subr.mxu0 0.0
    %408 = vmatpush1.msra.mxu0 0.0
    %409 = vmatprep.mubr.f32.mxu0 0.0
    %v410 = vand.u32 %v37, 4294901760
    %v411 = vsub.f32 %v37, %v410
    %412 = vmatmul.mubr.f32.gmra.mrb[0].mxu0 %v411
    %v413 = vpop.f32.mrb[0].mxu0
    %v414 = vadd.f32 %v304, %v413
    %v415 = vpop.f32.mrb[0].mxu0
    %416 = vmatprep.mubr.f32.mxu0 0.0
    %v417 = vand.u32 %v38, 4294901760
    %v418 = vsub.f32 %v38, %v417
    %419 = vmatmul.mubr.f32.gmra.mrb[0].mxu0 %v418
    %v420 = vpop.f32.mrb[0].mxu0
    %v421 = vadd.f32 %v310, %v420
    %v422 = vpop.f32.mrb[0].mxu0
    %423 = vdwg.mxu0
    %424 = vmatprep.subr.mxu0 0.0
    %v425 = vand.u32 %v39, 4294901760
    %426 = vmatpush1.msra.mxu0 %v425
    %427 = vmatprep.subr.mxu0 0.0
    %v428 = vand.u32 %v40, 4294901760
    %429 = vmatpush1.msra.mxu0 %v428
    %430 = vmatprep.subr.mxu0 0.0
    %v431 = vand.u32 %v41, 4294901760
    %432 = vmatpush1.msra.mxu0 %v431
    %433 = vmatprep.subr.mxu0 0.0
    %v434 = vand.u32 %v42, 4294901760
    %435 = vmatpush1.msra.mxu0 %v434
    %436 = vmatprep.subr.mxu0 0.0
    %v437 = vand.u32 %v43, 4294901760
    %438 = vmatpush1.msra.mxu0 %v437
    %439 = vmatprep.subr.mxu0 0.0
    %v440 = vand.u32 %v44, 4294901760
    %441 = vmatpush1.msra.mxu0 %v440
    %442 = vmatprep.subr.mxu0 0.0
    %v443 = vand.u32 %v45, 4294901760
    %444 = vmatpush1.msra.mxu0 %v443
    %445 = vmatprep.subr.mxu0 0.0
    %v446 = vand.u32 %v46, 4294901760
    %447 = vmatpush1.msra.mxu0 %v446
    %448 = vmatprep.subr.mxu0 0.0
    %v449 = vand.u32 %v47, 4294901760
    %450 = vmatpush1.msra.mxu0 %v449
    %451 = vmatprep.subr.mxu0 0.0
    %v452 = vand.u32 %v48, 4294901760
    %453 = vmatpush1.msra.mxu0 %v452
    %454 = vmatprep.subr.mxu0 0.0
    %v455 = vand.u32 %v49, 4294901760
    %456 = vmatpush1.msra.mxu0 %v455
    %457 = vmatprep.subr.mxu0 0.0
    %v458 = vand.u32 %v50, 4294901760
    %459 = vmatpush1.msra.mxu0 %v458
    %460 = vmatprep.subr.mxu0 0.0
    %v461 = vand.u32 %v51, 4294901760
    %462 = vmatpush1.msra.mxu0 %v461
    %463 = vmatprep.subr.mxu0 0.0
    %v464 = vand.u32 %v52, 4294901760
    %465 = vmatpush1.msra.mxu0 %v464
    %466 = vmatprep.subr.mxu0 0.0
    %v467 = vand.u32 %v53, 4294901760
    %468 = vmatpush1.msra.mxu0 %v467
    %469 = vmatprep.subr.mxu0 0.0
    %v470 = vand.u32 %v54, 4294901760
    %471 = vmatpush1.msra.mxu0 %v470
    %472 = vmatprep.subr.mxu0 0.0
    %473 = vmatpush1.msra.mxu0 0.0
    %474 = vmatprep.subr.mxu0 0.0
    %475 = vmatpush1.msra.mxu0 0.0
    %476 = vmatprep.subr.mxu0 0.0
    %477 = vmatpush1.msra.mxu0 0.0
    %478 = vmatprep.subr.mxu0 0.0
    %479 = vmatpush1.msra.mxu0 0.0
    %480 = vmatprep.subr.mxu0 0.0
    %481 = vmatpush1.msra.mxu0 0.0
    %482 = vmatprep.subr.mxu0 0.0
    %483 = vmatpush1.msra.mxu0 0.0
    %484 = vmatprep.subr.mxu0 0.0
    %485 = vmatpush1.msra.mxu0 0.0
    %486 = vmatprep.subr.mxu0 0.0
    %487 = vmatpush1.msra.mxu0 0.0
    %488 = vmatprep.subr.mxu0 0.0
    %489 = vmatpush1.msra.mxu0 0.0
    %490 = vmatprep.subr.mxu0 0.0
    %491 = vmatpush1.msra.mxu0 0.0
    %492 = vmatprep.subr.mxu0 0.0
    %493 = vmatpush1.msra.mxu0 0.0
    %494 = vmatprep.subr.mxu0 0.0
    %495 = vmatpush1.msra.mxu0 0.0
    %496 = vmatprep.subr.mxu0 0.0
    %497 = vmatpush1.msra.mxu0 0.0
    %498 = vmatprep.subr.mxu0 0.0
    %499 = vmatpush1.msra.mxu0 0.0
    %500 = vmatprep.subr.mxu0 0.0
    %501 = vmatpush1.msra.mxu0 0.0
    %502 = vmatprep.subr.mxu0 0.0
    %503 = vmatpush1.msra.mxu0 0.0
    %504 = vmatprep.mubr.f32.mxu0 0.0
    %v505 = vand.u32 %v37, 4294901760
    %v506 = vsub.f32 %v37, %v505
    %v507 = vand.u32 %v506, 4294901760
    %508 = vmatmul.mubr.f32.gmra.mrb[0].mxu0 %v507
    %v509 = vpop.f32.mrb[0].mxu0
    %v510 = vadd.f32 %v414, %v509
    %v511 = vpop.f32.mrb[0].mxu0
    %512 = vmatprep.mubr.f32.mxu0 0.0
    %v513 = vand.u32 %v38, 4294901760
    %v514 = vsub.f32 %v38, %v513
    %v515 = vand.u32 %v514, 4294901760
    %516 = vmatmul.mubr.f32.gmra.mrb[0].mxu0 %v515
    %v517 = vpop.f32.mrb[0].mxu0
    %v518 = vadd.f32 %v421, %v517
    %v519 = vpop.f32.mrb[0].mxu0
    %520 = vdwg.mxu0
    %521 = vmatprep.subr.mxu0 0.0
    %v522 = vand.u32 %v39, 4294901760
    %v523 = vsub.f32 %v39, %v522
    %v524 = vand.u32 %v523, 4294901760
    %525 = vmatpush1.msra.mxu0 %v524
    %526 = vmatprep.subr.mxu0 0.0
    %v527 = vand.u32 %v40, 4294901760
    %v528 = vsub.f32 %v40, %v527
    %v529 = vand.u32 %v528, 4294901760
    %530 = vmatpush1.msra.mxu0 %v529
    %531 = vmatprep.subr.mxu0 0.0
    %v532 = vand.u32 %v41, 4294901760
    %v533 = vsub.f32 %v41, %v532
    %v534 = vand.u32 %v533, 4294901760
    %535 = vmatpush1.msra.mxu0 %v534
    %536 = vmatprep.subr.mxu0 0.0
    %v537 = vand.u32 %v42, 4294901760
    %v538 = vsub.f32 %v42, %v537
    %v539 = vand.u32 %v538, 4294901760
    %540 = vmatpush1.msra.mxu0 %v539
    %541 = vmatprep.subr.mxu0 0.0
    %v542 = vand.u32 %v43, 4294901760
    %v543 = vsub.f32 %v43, %v542
    %v544 = vand.u32 %v543, 4294901760
    %545 = vmatpush1.msra.mxu0 %v544
    %546 = vmatprep.subr.mxu0 0.0
    %v547 = vand.u32 %v44, 4294901760
    %v548 = vsub.f32 %v44, %v547
    %v549 = vand.u32 %v548, 4294901760
    %550 = vmatpush1.msra.mxu0 %v549
    %551 = vmatprep.subr.mxu0 0.0
    %v552 = vand.u32 %v45, 4294901760
    %v553 = vsub.f32 %v45, %v552
    %v554 = vand.u32 %v553, 4294901760
    %555 = vmatpush1.msra.mxu0 %v554
    %556 = vmatprep.subr.mxu0 0.0
    %v557 = vand.u32 %v46, 4294901760
    %v558 = vsub.f32 %v46, %v557
    %v559 = vand.u32 %v558, 4294901760
    %560 = vmatpush1.msra.mxu0 %v559
    %561 = vmatprep.subr.mxu0 0.0
    %v562 = vand.u32 %v47, 4294901760
    %v563 = vsub.f32 %v47, %v562
    %v564 = vand.u32 %v563, 4294901760
    %565 = vmatpush1.msra.mxu0 %v564
    %566 = vmatprep.subr.mxu0 0.0
    %v567 = vand.u32 %v48, 4294901760
    %v568 = vsub.f32 %v48, %v567
    %v569 = vand.u32 %v568, 4294901760
    %570 = vmatpush1.msra.mxu0 %v569
    %571 = vmatprep.subr.mxu0 0.0
    %v572 = vand.u32 %v49, 4294901760
    %v573 = vsub.f32 %v49, %v572
    %v574 = vand.u32 %v573, 4294901760
    %575 = vmatpush1.msra.mxu0 %v574
    %576 = vmatprep.subr.mxu0 0.0
    %v577 = vand.u32 %v50, 4294901760
    %v578 = vsub.f32 %v50, %v577
    %v579 = vand.u32 %v578, 4294901760
    %580 = vmatpush1.msra.mxu0 %v579
    %581 = vmatprep.subr.mxu0 0.0
    %v582 = vand.u32 %v51, 4294901760
    %v583 = vsub.f32 %v51, %v582
    %v584 = vand.u32 %v583, 4294901760
    %585 = vmatpush1.msra.mxu0 %v584
    %586 = vmatprep.subr.mxu0 0.0
    %v587 = vand.u32 %v52, 4294901760
    %v588 = vsub.f32 %v52, %v587
    %v589 = vand.u32 %v588, 4294901760
    %590 = vmatpush1.msra.mxu0 %v589
    %591 = vmatprep.subr.mxu0 0.0
    %v592 = vand.u32 %v53, 4294901760
    %v593 = vsub.f32 %v53, %v592
    %v594 = vand.u32 %v593, 4294901760
    %595 = vmatpush1.msra.mxu0 %v594
    %596 = vmatprep.subr.mxu0 0.0
    %v597 = vand.u32 %v54, 4294901760
    %v598 = vsub.f32 %v54, %v597
    %v599 = vand.u32 %v598, 4294901760
    %600 = vmatpush1.msra.mxu0 %v599
    %601 = vmatprep.subr.mxu0 0.0
    %602 = vmatpush1.msra.mxu0 0.0
    %603 = vmatprep.subr.mxu0 0.0
    %604 = vmatpush1.msra.mxu0 0.0
    %605 = vmatprep.subr.mxu0 0.0
    %606 = vmatpush1.msra.mxu0 0.0
    %607 = vmatprep.subr.mxu0 0.0
    %608 = vmatpush1.msra.mxu0 0.0
    %609 = vmatprep.subr.mxu0 0.0
    %610 = vmatpush1.msra.mxu0 0.0
    %611 = vmatprep.subr.mxu0 0.0
    %612 = vmatpush1.msra.mxu0 0.0
    %613 = vmatprep.subr.mxu0 0.0
    %614 = vmatpush1.msra.mxu0 0.0
    %615 = vmatprep.subr.mxu0 0.0
    %616 = vmatpush1.msra.mxu0 0.0
    %617 = vmatprep.subr.mxu0 0.0
    %618 = vmatpush1.msra.mxu0 0.0
    %619 = vmatprep.subr.mxu0 0.0
    %620 = vmatpush1.msra.mxu0 0.0
    %621 = vmatprep.subr.mxu0 0.0
    %622 = vmatpush1.msra.mxu0 0.0
    %623 = vmatprep.subr.mxu0 0.0
    %624 = vmatpush1.msra.mxu0 0.0
    %625 = vmatprep.subr.mxu0 0.0
    %626 = vmatpush1.msra.mxu0 0.0
    %627 = vmatprep.subr.mxu0 0.0
    %628 = vmatpush1.msra.mxu0 0.0
    %629 = vmatprep.subr.mxu0 0.0
    %630 = vmatpush1.msra.mxu0 0.0
    %631 = vmatprep.subr.mxu0 0.0
    %632 = vmatpush1.msra.mxu0 0.0
    %633 = vmatprep.mubr.f32.mxu0 0.0
    %v634 = vand.u32 %v37, 4294901760
    %635 = vmatmul.mubr.f32.gmra.mrb[0].mxu0 %v634
    %v636 = vpop.f32.mrb[0].mxu0
    %v637 = vadd.f32 %v510, %v636
    %v638 = vpop.f32.mrb[0].mxu0
    %639 = vmatprep.mubr.f32.mxu0 0.0
    %v640 = vand.u32 %v38, 4294901760
    %641 = vmatmul.mubr.f32.gmra.mrb[0].mxu0 %v640
    %v642 = vpop.f32.mrb[0].mxu0
    %v643 = vadd.f32 %v518, %v642
    %v644 = vpop.f32.mrb[0].mxu0
    %645 = vdwg.mxu0
    %646 = vmatprep.subr.mxu0 0.0
    %v647 = vand.u32 %v39, 4294901760
    %648 = vmatpush1.msra.mxu0 %v647
    %649 = vmatprep.subr.mxu0 0.0
    %v650 = vand.u32 %v40, 4294901760
    %651 = vmatpush1.msra.mxu0 %v650
    %652 = vmatprep.subr.mxu0 0.0
    %v653 = vand.u32 %v41, 4294901760
    %654 = vmatpush1.msra.mxu0 %v653
    %655 = vmatprep.subr.mxu0 0.0
    %v656 = vand.u32 %v42, 4294901760
    %657 = vmatpush1.msra.mxu0 %v656
    %658 = vmatprep.subr.mxu0 0.0
    %v659 = vand.u32 %v43, 4294901760
    %660 = vmatpush1.msra.mxu0 %v659
    %661 = vmatprep.subr.mxu0 0.0
    %v662 = vand.u32 %v44, 4294901760
    %663 = vmatpush1.msra.mxu0 %v662
    %664 = vmatprep.subr.mxu0 0.0
    %v665 = vand.u32 %v45, 4294901760
    %666 = vmatpush1.msra.mxu0 %v665
    %667 = vmatprep.subr.mxu0 0.0
    %v668 = vand.u32 %v46, 4294901760
    %669 = vmatpush1.msra.mxu0 %v668
    %670 = vmatprep.subr.mxu0 0.0
    %v671 = vand.u32 %v47, 4294901760
    %672 = vmatpush1.msra.mxu0 %v671
    %673 = vmatprep.subr.mxu0 0.0
    %v674 = vand.u32 %v48, 4294901760
    %675 = vmatpush1.msra.mxu0 %v674
    %676 = vmatprep.subr.mxu0 0.0
    %v677 = vand.u32 %v49, 4294901760
    %678 = vmatpush1.msra.mxu0 %v677
    %679 = vmatprep.subr.mxu0 0.0
    %v680 = vand.u32 %v50, 4294901760
    %681 = vmatpush1.msra.mxu0 %v680
    %682 = vmatprep.subr.mxu0 0.0
    %v683 = vand.u32 %v51, 4294901760
    %684 = vmatpush1.msra.mxu0 %v683
    %685 = vmatprep.subr.mxu0 0.0
    %v686 = vand.u32 %v52, 4294901760
    %687 = vmatpush1.msra.mxu0 %v686
    %688 = vmatprep.subr.mxu0 0.0
    %v689 = vand.u32 %v53, 4294901760
    %690 = vmatpush1.msra.mxu0 %v689
    %691 = vmatprep.subr.mxu0 0.0
    %v692 = vand.u32 %v54, 4294901760
    %693 = vmatpush1.msra.mxu0 %v692
    %694 = vmatprep.subr.mxu0 0.0
    %695 = vmatpush1.msra.mxu0 0.0
    %696 = vmatprep.subr.mxu0 0.0
    %697 = vmatpush1.msra.mxu0 0.0
    %698 = vmatprep.subr.mxu0 0.0
    %699 = vmatpush1.msra.mxu0 0.0
    %700 = vmatprep.subr.mxu0 0.0
    %701 = vmatpush1.msra.mxu0 0.0
    %702 = vmatprep.subr.mxu0 0.0
    %703 = vmatpush1.msra.mxu0 0.0
    %704 = vmatprep.subr.mxu0 0.0
    %705 = vmatpush1.msra.mxu0 0.0
    %706 = vmatprep.subr.mxu0 0.0
    %707 = vmatpush1.msra.mxu0 0.0
    %708 = vmatprep.subr.mxu0 0.0
    %709 = vmatpush1.msra.mxu0 0.0
    %710 = vmatprep.subr.mxu0 0.0
    %711 = vmatpush1.msra.mxu0 0.0
    %712 = vmatprep.subr.mxu0 0.0
    %713 = vmatpush1.msra.mxu0 0.0
    %714 = vmatprep.subr.mxu0 0.0
    %715 = vmatpush1.msra.mxu0 0.0
    %716 = vmatprep.subr.mxu0 0.0
    %717 = vmatpush1.msra.mxu0 0.0
    %718 = vmatprep.subr.mxu0 0.0
    %719 = vmatpush1.msra.mxu0 0.0
    %720 = vmatprep.subr.mxu0 0.0
    %721 = vmatpush1.msra.mxu0 0.0
    %722 = vmatprep.subr.mxu0 0.0
    %723 = vmatpush1.msra.mxu0 0.0
    %724 = vmatprep.subr.mxu0 0.0
    %725 = vmatpush1.msra.mxu0 0.0
    %726 = vmatprep.mubr.f32.mxu0 0.0
    %v727 = vand.u32 %v37, 4294901760
    %728 = vmatmul.mubr.f32.gmra.mrb[0].mxu0 %v727
    %v729 = vpop.f32.mrb[0].mxu0
    %v730 = vadd.f32 %v637, %v729
    %v731 = vpop.f32.mrb[0].mxu0
    %732 = vmatprep.mubr.f32.mxu0 0.0
    %v733 = vand.u32 %v38, 4294901760
    %734 = vmatmul.mubr.f32.gmra.mrb[0].mxu0 %v733
    %v735 = vpop.f32.mrb[0].mxu0
    %v736 = vadd.f32 %v643, %v735
    %v737 = vpop.f32.mrb[0].mxu0
    %738 = vdwg.mxu0
    %v739 = vadd.f32 %v35, %v730
    %v740 = vadd.f32 %v36, %v736
    %741 = vst [vmem:[#allocation2] sm:$0xff] %v739
    %742 = vst [vmem:[#allocation2 + $0x8] sm:$0xff] %v740
    // Predicated region
    $region22: #{_matmul_bias_pallas.1} parent=1 // pred_check
      %p743 = pneg %p29
    $region23: #{_matmul_bias_pallas.1} parent=1 // pred_check_branch
      %745 = sbr.rel (%p743) target = $region25
    $region24: #{_matmul_bias_pallas.1} parent=1 // pred_region
      %v746 = vld [vmem:[#allocation2] sm:$0xff]
      %v747 = vld [vmem:[#allocation2 + $0x8] sm:$0xff]
      %v748 = vld [vmem:[%s2] sm:$0x1]
      %v750 = vlaneseq
      %v751 = vshrl.u32 %v750, 7
      %v752 = vsub.s32 0, %v751
      %v753 = vrot.slane %v748, %v752
      %v755 = vadd.f32 %v746, %v753
      %v756 = vadd.f32 %v747, %v753
      %757 = vst [vmem:[#allocation6] sm:$0xff] %v755
      %758 = vst [vmem:[#allocation6 + $0x8] sm:$0xff] %v756
    $region25: #{_matmul_bias_pallas.1} parent=1 // pred_fallthru
      _
    // Predicated region
    $region26: #{_matmul_bias_pallas.1} parent=1 // pred_check
      _
    $region27: #{_matmul_bias_pallas.1} parent=1 // pred_check_branch
      %760 = sbr.rel (0) target = $region29
    $region28: #{_matmul_bias_pallas.1} parent=1 // pred_region
      %s762 = ssub.s32 256, 256
      %763 = vsyncadd [#allocation5], %s762
      %s764 = sshll.u32 [#allocation6], 4
      %s765 = int_to_ptr.vmem [resolvable:$true] %s764
      %770 = dma.vmem_to_hbm [thread:$0]  %s765, 256, %s3, [#allocation5], 128, 128, 8
    $region29: #{_matmul_bias_pallas.1} parent=1 // pred_fallthru
      _
    // Predicated region
    $region30: #{_matmul_bias_pallas.1} parent=1 // pred_check
      _
    $region31: #{_matmul_bias_pallas.1} parent=1 // pred_check_branch
      %772 = sbr.rel (0) target = $region33
    $region32: #{_matmul_bias_pallas.1} parent=1 // pred_region
      %773 = dma.done [#allocation5], 256
    $region33: #{_matmul_bias_pallas.1} parent=1 // pred_fallthru
      _
    %774 = vsyncpa [#allocation4], 1
    %775 = vsyncpa [#allocation5], 1

</llo_original>
